<compile_context>
chip_gen: v6e
topology: v6e:2x2x1
jax: 0.10.0
libtpu: 0.0.40
codegen_flags: <defaults>
</compile_context>

<pallas_src>
import jax
import jax.numpy as jnp
from jax.experimental import pallas as pl
from jax.experimental.pallas import tpu as pltpu

INPUT_SIZE = 16                 # vocab size == feature size of the RNN
SEQ = INPUT_SIZE // 4           # sequence length after the view/swapaxes (= 4)
HIDDEN = 12
OUTPUT = 3
BATCH = 2

D = INPUT_SIZE                  # RNN feature size
V = INPUT_SIZE                  # vocab size
T = SEQ
H = HIDDEN
H2 = 2 * HIDDEN
O = OUTPUT

# ----- packed parameter slab layout (all row offsets are sublane-aligned) ----
W_LANES = 128
ROW_WBIG = 0                    # W_big               (V*D, T*2H) = (256, 96)
ROW_BROW = V * D                # tiled RNN bias      (1, T*2H)   = (1, 96)
ROW_WHH = ROW_BROW + 8          # whh_f               (H, H)      = (12, 12)
ROW_WFC = ROW_WHH + 16          # [wfc_f ; wfc_b]     (2H, O)     = (24, 3)
ROW_BFC = ROW_WFC + 24          # bfc                 (1, O)      = (1, 3)
W_ROWS = ROW_BFC + 8            # 312 x 128 x 4B ~= 156 KB


def rnn_fc_kernel(idx_ref, w_ref, o_ref):
    """Fused embedding + bidirectional tanh-RNN + final Linear, all on-chip.

    idx_ref: (B, INPUT_SIZE) int32 token ids
    w_ref:   (W_ROWS, 128)   f32 packed parameter slab (single DMA)
    o_ref:   (B, OUTPUT)     f32
    """
    B = idx_ref.shape[0]
    VD = V * D

    # --- static slices of the packed weight slab (hoisted, loaded once) -----
    w_big = w_ref[ROW_WBIG:ROW_WBIG + VD, :]           # (256, 128) full lane width
    b_row = w_ref[ROW_BROW:ROW_BROW + 1, :]            # (1, 128)   full lane width
    whh = w_ref[ROW_WHH:ROW_WHH + H, :H]               # (H, H)     forward Whh
    wfc_f = w_ref[ROW_WFC:ROW_WFC + H, :O]             # (H, O)
    wfc_b = w_ref[ROW_WFC + H:ROW_WFC + H2, :O]        # (H, O)
    bfc = w_ref[ROW_BFC:ROW_BFC + 1, :O]               # (1, O)

    # --- one-hot built directly in its final 2-D (B, V*D) lane layout -------
    # Column c = v*D + d is hot iff idx[b, d] == v, i.e. iff c == idx[b,d]*D + d.
    idx = idx_ref[...]                                                  # (B, D)
    lin = idx * D + jax.lax.broadcasted_iota(jnp.int32, (B, D), 1)      # (B, D)
    lane = jax.lax.broadcasted_iota(jnp.int32, (B, D, VD), 2)           # (B, D, 256)
    onehot = jnp.sum((lane == lin[:, :, None]).astype(jnp.float32),
                     axis=1)                                            # (B, 256)

    # --- single full-lane-width MXU pass: embedding + input projection ------
    # xp[b, t*2H + h] = sum_d emb[idx[b,d], t] * wih_cat[d, h] + bias_cat[h]
    xp = jnp.dot(onehot, w_big, preferred_element_type=jnp.float32) + b_row  # (B, 128)

    # --- forward direction: recurrence with only h @ Whh on the chain -------
    h_f = jnp.tanh(xp[:, 0:H])                          # h0 = 0 -> skip matmul
    for t in range(1, T):                               # static, tiny -> unrolled
        h_f = jnp.tanh(xp[:, t * H2:t * H2 + H]
                       + jnp.dot(h_f, whh, preferred_element_type=jnp.float32))

    # --- backward direction ---------------------------------------------------
    # out[:, -1, H:] of the bidirectional RNN is the reverse direction's FIRST
    # processed step with zero initial hidden, so no reverse Whh sweep needed.
    h_b = jnp.tanh(xp[:, (T - 1) * H2 + H:T * H2])

    # --- final Linear, split per direction (no lane concat) -------------------
    out = (jnp.dot(h_f, wfc_f, preferred_element_type=jnp.float32)
           + jnp.dot(h_b, wfc_b, preferred_element_type=jnp.float32)
           + bfc)
    o_ref[...] = out.astype(o_ref.dtype)


def init_params(key):
    """PyTorch-like init; RNN/Linear weights already transposed, biases summed."""
    ks = jax.random.split(key, 11)
    k = 1.0 / jnp.sqrt(jnp.float32(HIDDEN))
    u = lambda kk, shape: jax.random.uniform(kk, shape, jnp.float32, -k, k)
    return {
        # nn.Embedding(input_size, seq): weight (input_size, seq), N(0,1)
        "emb": jax.random.normal(ks[0], (INPUT_SIZE, SEQ), jnp.float32),
        # nn.RNN forward direction (transposed: (D,H)/(H,H)); b = b_ih + b_hh
        "wih_f": u(ks[1], (INPUT_SIZE, HIDDEN)),
        "whh_f": u(ks[2], (HIDDEN, HIDDEN)),
        "b_f": u(ks[3], (1, HIDDEN)) + u(ks[4], (1, HIDDEN)),
        # nn.RNN reverse direction (reverse Whh unused because of out[:, -1, :])
        "wih_b": u(ks[5], (INPUT_SIZE, HIDDEN)),
        "b_b": u(ks[6], (1, HIDDEN)) + u(ks[7], (1, HIDDEN)),
        # nn.Linear(2*hidden, output): stored transposed, split per direction
        "wfc_f": u(ks[8], (HIDDEN, OUTPUT)),
        "wfc_b": u(ks[9], (HIDDEN, OUTPUT)),
        "bfc": u(ks[10], (1, OUTPUT)),
    }


def pack_params(p):
    """One-time packing of all params into a single (312, 128) f32 slab.

    Precombines embedding x input-projection into W_big so the kernel needs a
    single 2-D matmul:
        W_big[v*D + d, t*2H + h] = emb[v, t] * [wih_f | wih_b][d, h]
    and pre-tiles the summed RNN biases into one (1, T*2H) row.
    """
    wih_cat = jnp.concatenate([p["wih_f"], p["wih_b"]], axis=1)         # (D, 2H)
    b_cat = jnp.concatenate([p["b_f"], p["b_b"]], axis=1)               # (1, 2H)
    wfc_cat = jnp.concatenate([p["wfc_f"], p["wfc_b"]], axis=0)         # (2H, O)
    w_big = jnp.einsum("vt,dh->vdth", p["emb"], wih_cat).reshape(V * D, T * H2)
    b_row = jnp.tile(b_cat, (1, T))                                     # (1, T*2H)

    slab = jnp.zeros((W_ROWS, W_LANES), jnp.float32)
    slab = slab.at[ROW_WBIG:ROW_WBIG + V * D, :T * H2].set(w_big)
    slab = slab.at[ROW_BROW:ROW_BROW + 1, :T * H2].set(b_row)
    slab = slab.at[ROW_WHH:ROW_WHH + H, :H].set(p["whh_f"])
    slab = slab.at[ROW_WFC:ROW_WFC + H2, :O].set(wfc_cat)
    slab = slab.at[ROW_BFC:ROW_BFC + 1, :O].set(p["bfc"])
    return slab


@jax.jit
def lstm_forward(x_idx, w_slab):
    """x_idx: (B, INPUT_SIZE) integer token ids; w_slab: packed (312,128) params."""
    B = x_idx.shape[0]
    return pl.pallas_call(
        rnn_fc_kernel,
        out_shape=jax.ShapeDtypeStruct((B, OUTPUT), jnp.float32),
        grid=(1,),
        in_specs=[
            pl.BlockSpec((B, INPUT_SIZE), lambda i: (0, 0)),
            pl.BlockSpec((W_ROWS, W_LANES), lambda i: (0, 0)),
        ],
        out_specs=pl.BlockSpec((B, OUTPUT), lambda i: (0, 0)),
        compiler_params=pltpu.CompilerParams(
            # grid of 1 -> semantics irrelevant at B=2.  If batch is ever
            # scaled up: block the batch axis (8-row-aligned, ideally 128+ for
            # the MXU M dim), index-map idx/out over it, mark it "parallel"
            # (uses both v7x TensorCores), and re-derive per-block VMEM under
            # the 64 MiB v7x budget.  The weight slab stays a single
            # grid-invariant block.
            dimension_semantics=("arbitrary",)),
    )(x_idx.astype(jnp.int32), w_slab)


def reference_forward(x_idx, params):
    """Pure-JAX reference matching the PyTorch semantics (unpacked params)."""
    emb = jnp.take(params["emb"], x_idx.astype(jnp.int32), axis=0)    # (B, D, SEQ)
    xe = jnp.swapaxes(jnp.reshape(emb, (-1, INPUT_SIZE, SEQ)), 1, 2)  # (B, SEQ, D)
    B = xe.shape[0]
    h_f = jnp.zeros((B, HIDDEN), jnp.float32)
    for t in range(SEQ):
        h_f = jnp.tanh(xe[:, t, :] @ params["wih_f"] + h_f @ params["whh_f"]
                       + params["b_f"])
    h_b = jnp.tanh(xe[:, SEQ - 1, :] @ params["wih_b"] + params["b_b"])
    return h_f @ params["wfc_f"] + h_b @ params["wfc_b"] + params["bfc"]


if __name__ == "__main__":
    key = jax.random.PRNGKey(0)
    k_param, k_data = jax.random.split(key)
    params = init_params(k_param)
    w_slab = pack_params(params)          # one-time parameter packing (not per call)

    # integer token ids, shape (batch, input_size), values in [0, input_size)
    x = jax.random.randint(k_data, (BATCH, INPUT_SIZE), 0, INPUT_SIZE, jnp.int32)

    out = lstm_forward(x, w_slab)
    out = jax.block_until_ready(out)

    ref = reference_forward(x, params)
    assert out.shape == (BATCH, OUTPUT)
    # Tolerance accounts for the reordered f32 summation of the precombined
    # W_big matmul vs the lookup-then-matmul reference; real bugs are O(0.1+).
    assert jnp.allclose(out, ref, atol=1e-3, rtol=1e-3), "mismatch vs reference"
    print("KERNEL_OK")
</pallas_src>

<mosaic_0001>
module attributes {stable_mosaic.version = 11 : i64} {
  func.func @rnn_fc_kernel(%arg0: i32, %arg1: memref<2x16xi32, #tpu.memory_space<vmem>>, %arg2: memref<312x128xf32, #tpu.memory_space<vmem>>, %arg3: memref<2x3xf32, #tpu.memory_space<vmem>>) attributes {dimension_semantics = [#tpu.dimension_semantics<arbitrary>], iteration_bounds = array<i64: 1>, scalar_prefetch = 0 : i64, scratch_operands = 0 : i64, tpu.core_type = #tpu.core_type<tc>, window_params = [{pipeline_mode = #tpu.pipeline_mode<synchronous>, transform_indices = @transform_0, window_bounds = array<i64: 2, 16>}, {pipeline_mode = #tpu.pipeline_mode<synchronous>, transform_indices = @transform_1, window_bounds = array<i64: 312, 128>}, {pipeline_mode = #tpu.pipeline_mode<synchronous>, transform_indices = @transform_2, window_bounds = array<i64: 2, 3>}]} {
    %c0 = arith.constant 0 : index
    %c0_0 = arith.constant 0 : index
    %0 = vector.load %arg2[%c0, %c0_0] : memref<312x128xf32, #tpu.memory_space<vmem>>, vector<256x128xf32>
    %c256 = arith.constant 256 : index
    %c0_1 = arith.constant 0 : index
    %1 = vector.load %arg2[%c256, %c0_1] : memref<312x128xf32, #tpu.memory_space<vmem>>, vector<1x128xf32>
    %c264 = arith.constant 264 : index
    %c0_2 = arith.constant 0 : index
    %2 = vector.load %arg2[%c264, %c0_2] : memref<312x128xf32, #tpu.memory_space<vmem>>, vector<12x12xf32>
    %c280 = arith.constant 280 : index
    %c0_3 = arith.constant 0 : index
    %3 = vector.load %arg2[%c280, %c0_3] : memref<312x128xf32, #tpu.memory_space<vmem>>, vector<12x3xf32>
    %c292 = arith.constant 292 : index
    %c0_4 = arith.constant 0 : index
    %4 = vector.load %arg2[%c292, %c0_4] : memref<312x128xf32, #tpu.memory_space<vmem>>, vector<12x3xf32>
    %c304 = arith.constant 304 : index
    %c0_5 = arith.constant 0 : index
    %5 = vector.load %arg2[%c304, %c0_5] : memref<312x128xf32, #tpu.memory_space<vmem>>, vector<1x3xf32>
    %c0_6 = arith.constant 0 : index
    %c0_7 = arith.constant 0 : index
    %6 = vector.load %arg1[%c0_6, %c0_7] : memref<2x16xi32, #tpu.memory_space<vmem>>, vector<2x16xi32>
    %c16_i32 = arith.constant 16 : i32
    %7 = vector.broadcast %c16_i32 : i32 to vector<2x16xi32>
    %8 = arith.muli %6, %7 : vector<2x16xi32>
    %9 = tpu.iota {dimensions = array<i32: 1>} : vector<2x16xi32>
    %10 = arith.addi %8, %9 : vector<2x16xi32>
    %11 = tpu.iota {dimensions = array<i32: 2>} : vector<2x16x256xi32>
    %12 = vector.shape_cast %10 : vector<2x16xi32> to vector<2x16x1xi32>
    %13 = vector.broadcast %12 : vector<2x16x1xi32> to vector<2x16x256xi32>
    %14 = arith.cmpi eq, %11, %13 : vector<2x16x256xi32>
    %15 = arith.extui %14 : vector<2x16x256xi1> to vector<2x16x256xi32>
    %16 = arith.sitofp %15 : vector<2x16x256xi32> to vector<2x16x256xf32>
    %cst = arith.constant dense<0.000000e+00> : vector<2x256xf32>
    %17 = vector.multi_reduction <add>, %16, %cst [1] : vector<2x16x256xf32> to vector<2x256xf32>
    %cst_8 = arith.constant dense<0.000000e+00> : vector<2x128xf32>
    %18 = tpu.matmul %17, %0, %cst_8 {dimension_numbers = #tpu.dot_dimension_numbers<[1], [0], [0], [1], [0, 0, 1, 1], [], []>} : vector<2x256xf32>, vector<256x128xf32>, vector<2x128xf32> -> vector<2x128xf32>
    %19 = vector.broadcast %1 : vector<1x128xf32> to vector<2x128xf32>
    %20 = arith.addf %18, %19 : vector<2x128xf32>
    %21 = vector.extract_strided_slice %20 {offsets = [0, 0], sizes = [2, 12], strides = [1, 1]} : vector<2x128xf32> to vector<2x12xf32>
    %22 = math.tanh %21 : vector<2x12xf32>
    %23 = vector.extract_strided_slice %20 {offsets = [0, 24], sizes = [2, 12], strides = [1, 1]} : vector<2x128xf32> to vector<2x12xf32>
    %cst_9 = arith.constant dense<0.000000e+00> : vector<2x12xf32>
    %24 = tpu.matmul %22, %2, %cst_9 {dimension_numbers = #tpu.dot_dimension_numbers<[1], [0], [0], [1], [0, 0, 1, 1], [], []>} : vector<2x12xf32>, vector<12x12xf32>, vector<2x12xf32> -> vector<2x12xf32>
    %25 = arith.addf %23, %24 : vector<2x12xf32>
    %26 = math.tanh %25 : vector<2x12xf32>
    %27 = vector.extract_strided_slice %20 {offsets = [0, 48], sizes = [2, 12], strides = [1, 1]} : vector<2x128xf32> to vector<2x12xf32>
    %cst_10 = arith.constant dense<0.000000e+00> : vector<2x12xf32>
    %28 = tpu.matmul %26, %2, %cst_10 {dimension_numbers = #tpu.dot_dimension_numbers<[1], [0], [0], [1], [0, 0, 1, 1], [], []>} : vector<2x12xf32>, vector<12x12xf32>, vector<2x12xf32> -> vector<2x12xf32>
    %29 = arith.addf %27, %28 : vector<2x12xf32>
    %30 = math.tanh %29 : vector<2x12xf32>
    %31 = vector.extract_strided_slice %20 {offsets = [0, 72], sizes = [2, 12], strides = [1, 1]} : vector<2x128xf32> to vector<2x12xf32>
    %cst_11 = arith.constant dense<0.000000e+00> : vector<2x12xf32>
    %32 = tpu.matmul %30, %2, %cst_11 {dimension_numbers = #tpu.dot_dimension_numbers<[1], [0], [0], [1], [0, 0, 1, 1], [], []>} : vector<2x12xf32>, vector<12x12xf32>, vector<2x12xf32> -> vector<2x12xf32>
    %33 = arith.addf %31, %32 : vector<2x12xf32>
    %34 = math.tanh %33 : vector<2x12xf32>
    %35 = vector.extract_strided_slice %20 {offsets = [0, 84], sizes = [2, 12], strides = [1, 1]} : vector<2x128xf32> to vector<2x12xf32>
    %36 = math.tanh %35 : vector<2x12xf32>
    %cst_12 = arith.constant dense<0.000000e+00> : vector<2x3xf32>
    %37 = tpu.matmul %34, %3, %cst_12 {dimension_numbers = #tpu.dot_dimension_numbers<[1], [0], [0], [1], [0, 0, 1, 1], [], []>} : vector<2x12xf32>, vector<12x3xf32>, vector<2x3xf32> -> vector<2x3xf32>
    %cst_13 = arith.constant dense<0.000000e+00> : vector<2x3xf32>
    %38 = tpu.matmul %36, %4, %cst_13 {dimension_numbers = #tpu.dot_dimension_numbers<[1], [0], [0], [1], [0, 0, 1, 1], [], []>} : vector<2x12xf32>, vector<12x3xf32>, vector<2x3xf32> -> vector<2x3xf32>
    %39 = arith.addf %37, %38 : vector<2x3xf32>
    %40 = vector.broadcast %5 : vector<1x3xf32> to vector<2x3xf32>
    %41 = arith.addf %39, %40 : vector<2x3xf32>
    %c0_14 = arith.constant 0 : index
    %c0_15 = arith.constant 0 : index
    %42 = vector.load %arg3[%c0_14, %c0_15] : memref<2x3xf32, #tpu.memory_space<vmem>>, vector<2x3xf32>
    tpu.vector_store %arg3[%c0_14, %c0_15], %41 {strides = array<i32>} : memref<2x3xf32, #tpu.memory_space<vmem>>, vector<2x3xf32>,
    return
  }
  func.func @transform_0(%arg0: i32) -> (i32, i32) {
    %c0_i32 = arith.constant 0 : i32
    %c0_i32_0 = arith.constant 0 : i32
    %c0_i32_1 = arith.constant 0 : i32
    return %c0_i32, %c0_i32_0 : i32, i32
  }
  func.func @transform_1(%arg0: i32) -> (i32, i32) {
    %c0_i32 = arith.constant 0 : i32
    %c0_i32_0 = arith.constant 0 : i32
    %c0_i32_1 = arith.constant 0 : i32
    return %c0_i32, %c0_i32_0 : i32, i32
  }
  func.func @transform_2(%arg0: i32) -> (i32, i32) {
    %c0_i32 = arith.constant 0 : i32
    %c0_i32_0 = arith.constant 0 : i32
    %c0_i32_1 = arith.constant 0 : i32
    return %c0_i32, %c0_i32_0 : i32, i32
  }
}

</mosaic_0001>

<llo_original>
// kernel: lstm_forward.1
$region0: #{lstm_forward.1}
  #allocation0 [shape = 'u32[]', space=smem, size = 0x4, offset = 0x4, fixed_abs, tag = 'smem constant byte address 0x4 - core index']
  #allocation1 [shape = 'u32[144,128]{1,0:T(1,128)}', space=vmem, size = 0x12000, scoped, tag = 'internal scratch']
  %s0 = inlined_call_operand.hbm [shape: s32[2,16], index: 0, kind: input, shape index: {}]
  %s1 = inlined_call_operand.hbm [shape: f32[312,128], index: 1, kind: input, shape index: {}]
  %s2 = inlined_call_operand.hbm [shape: f32[2,3], index: 2, kind: output, shape index: {}]
  %s3 = sld [smem:[#allocation0]]
  $region26: #{lstm_forward.1} parent=0
    _
  %s5 = ssub.s32 1, %s3
  %s6 = scalar_select 0, %s5, %s3
  $region1: #{lstm_forward.1} parent=0
    #allocation2 [shape = 'u8[1024]{0}', space=vmem, size = 0x400, scoped, tag = 'input window, operand 0, single buffered']
    #allocation3 [shape = 's32[1]{0}', space=sflag, size = 0x4, scoped, tag = 'scoped memory for lstm_forward.1']
    #allocation4 [shape = 's32[1]{0}', space=sflag, size = 0x4, scoped, tag = 'scoped memory for lstm_forward.1']
    #allocation5 [shape = 'u8[159744]{0}', space=vmem, size = 0x27000, scoped, tag = 'input window, operand 1, single buffered']
    #allocation6 [shape = 's32[1]{0}', space=sflag, size = 0x4, scoped, tag = 'scoped memory for lstm_forward.1']
    #allocation7 [shape = 'u8[1024]{0}', space=vmem, size = 0x400, scoped, tag = 'output window, operand 0, single buffered']
    %7 = vsyncpa [#allocation3], 0
    %8 = vsyncpa [#allocation6], 0
    %9 = vsyncpa [#allocation4], 0
    // Predicated region
    $region2: #{lstm_forward.1} parent=1 // pred_check
      _
    $region3: #{lstm_forward.1} parent=1 // pred_check_branch
      %11 = sbr.rel (0) target = $region5
    $region4: #{lstm_forward.1} parent=1 // pred_region
      %s13 = ssub.s32 32, 32
      %14 = vsyncadd [#allocation3], %s13
      %s16 = sshll.u32 [#allocation2], 4
      %s17 = int_to_ptr.vmem [resolvable:$true] %s16
      %19 = dma.hbm_to_vmem [thread:$0]  %s0, 32, %s17, [#allocation3]
    $region5: #{lstm_forward.1} parent=1 // pred_fallthru
      _
    // Predicated region
    $region6: #{lstm_forward.1} parent=1 // pred_check
      _
    $region7: #{lstm_forward.1} parent=1 // pred_check_branch
      %21 = sbr.rel (0) target = $region9
    $region8: #{lstm_forward.1} parent=1 // pred_region
      %s23 = ssub.s32 4992, 4992
      %24 = vsyncadd [#allocation6], %s23
      %s25 = sshll.u32 [#allocation5], 4
      %s26 = int_to_ptr.vmem [resolvable:$true] %s25
      %31 = dma.hbm_to_vmem [thread:$0]  %s1, 4992, %s26, [#allocation6], 128, 128, 8
    $region9: #{lstm_forward.1} parent=1 // pred_fallthru
      _
    // Predicated region
    $region10: #{lstm_forward.1} parent=1 // pred_check
      _
    $region11: #{lstm_forward.1} parent=1 // pred_check_branch
      %33 = sbr.rel (0) target = $region13
    $region12: #{lstm_forward.1} parent=1 // pred_region
      %34 = dma.done [#allocation3], 32
    $region13: #{lstm_forward.1} parent=1 // pred_fallthru
      _
    // Predicated region
    $region14: #{lstm_forward.1} parent=1 // pred_check
      _
    $region15: #{lstm_forward.1} parent=1 // pred_check_branch
      %36 = sbr.rel (0) target = $region17
    $region16: #{lstm_forward.1} parent=1 // pred_region
      %37 = dma.done [#allocation6], 4992
    $region17: #{lstm_forward.1} parent=1 // pred_fallthru
      _
    %v38 = vld [vmem:[#allocation5] sm:$0xff]
    %v39 = vld [vmem:[#allocation5 + $0x8] sm:$0xff]
    %v40 = vld [vmem:[#allocation5 + $0x10] sm:$0xff]
    %v41 = vld [vmem:[#allocation5 + $0x18] sm:$0xff]
    %v42 = vld [vmem:[#allocation5 + $0x20] sm:$0xff]
    %v43 = vld [vmem:[#allocation5 + $0x28] sm:$0xff]
    %v44 = vld [vmem:[#allocation5 + $0x30] sm:$0xff]
    %v45 = vld [vmem:[#allocation5 + $0x38] sm:$0xff]
    %v46 = vld [vmem:[#allocation5 + $0x40] sm:$0xff]
    %v47 = vld [vmem:[#allocation5 + $0x48] sm:$0xff]
    %v48 = vld [vmem:[#allocation5 + $0x50] sm:$0xff]
    %v49 = vld [vmem:[#allocation5 + $0x58] sm:$0xff]
    %v50 = vld [vmem:[#allocation5 + $0x60] sm:$0xff]
    %v51 = vld [vmem:[#allocation5 + $0x68] sm:$0xff]
    %v52 = vld [vmem:[#allocation5 + $0x70] sm:$0xff]
    %v53 = vld [vmem:[#allocation5 + $0x78] sm:$0xff]
    %v54 = vld [vmem:[#allocation5 + $0x80] sm:$0xff]
    %v55 = vld [vmem:[#allocation5 + $0x88] sm:$0xff]
    %v56 = vld [vmem:[#allocation5 + $0x90] sm:$0xff]
    %v57 = vld [vmem:[#allocation5 + $0x98] sm:$0xff]
    %v58 = vld [vmem:[#allocation5 + $0xa0] sm:$0xff]
    %v59 = vld [vmem:[#allocation5 + $0xa8] sm:$0xff]
    %v60 = vld [vmem:[#allocation5 + $0xb0] sm:$0xff]
    %v61 = vld [vmem:[#allocation5 + $0xb8] sm:$0xff]
    %v62 = vld [vmem:[#allocation5 + $0xc0] sm:$0xff]
    %v63 = vld [vmem:[#allocation5 + $0xc8] sm:$0xff]
    %v64 = vld [vmem:[#allocation5 + $0xd0] sm:$0xff]
    %v65 = vld [vmem:[#allocation5 + $0xd8] sm:$0xff]
    %v66 = vld [vmem:[#allocation5 + $0xe0] sm:$0xff]
    %v67 = vld [vmem:[#allocation5 + $0xe8] sm:$0xff]
    %v68 = vld [vmem:[#allocation5 + $0xf0] sm:$0xff]
    %v69 = vld [vmem:[#allocation5 + $0xf8] sm:$0xff]
    %v70 = vld [vmem:[#allocation5 + $0x100] sm:$0x1]
    %v71 = vld [vmem:[#allocation5 + $0x108] sm:$0xff]
    %v72 = vld [vmem:[#allocation5 + $0x110] sm:$0xf]
    %v73 = vld [vmem:[#allocation5 + $0x118] sm:$0xff]
    %v74 = vld [vmem:[#allocation5 + $0x120] sm:$0xf]
    %v75 = vld [vmem:[#allocation5 + $0x124] sm:$0xff]
    %v76 = vld [vmem:[#allocation5 + $0x12c] sm:$0xf]
    %v77 = vld [vmem:[#allocation5 + $0x130] sm:$0x1]
    %v78 = vld [vmem:[#allocation2] sm:$0x3]
    %v79 = vmul.u32 %v78, 16
    %v80 = vlaneseq
    %v81 = vand.u32 %v80, 127
    %v82 = vadd.s32 %v79, %v81
    %v83 = vadd.s32 %v81, 128
    %v84 = vlaneseq
    %v85 = vshrl.u32 %v84, 7
    %v86 = vsub.s32 0, %v85
    %v87 = vrot.slane %v82, %v86
    %89 = vbcast.lane.b32.xlu0 %v87, 256
    %v90 = vpop.permute.xlu0 %89
    %s92 = sor.u32 256, 8
    %93 = vbcast.lane.b32.xlu0 %v87, %s92
    %v94 = vpop.permute.xlu0 %93
    %v95 = vlaneseq
    %v96 = vshrl.u32 %v95, 7
    %v97 = vsub.s32 1, %v96
    %v98 = vrot.slane %v82, %v97
    %100 = vbcast.lane.b32.xlu0 %v98, 256
    %v101 = vpop.permute.xlu0 %100
    %s103 = sor.u32 256, 8
    %104 = vbcast.lane.b32.xlu0 %v98, %s103
    %v105 = vpop.permute.xlu0 %104
    %vm106 = vcmp.eq.s32.totalorder %v81, %v90
    %vm107 = vcmp.eq.s32.totalorder %v83, %v90
    %vm108 = vcmp.eq.s32.totalorder %v81, %v94
    %vm109 = vcmp.eq.s32.totalorder %v83, %v94
    %vm110 = vcmp.eq.s32.totalorder %v81, %v101
    %vm111 = vcmp.eq.s32.totalorder %v83, %v101
    %vm112 = vcmp.eq.s32.totalorder %v81, %v105
    %vm113 = vcmp.eq.s32.totalorder %v83, %v105
    %v114 = vsel %vm106, 1, 0
    %v115 = vsel %vm107, 1, 0
    %v116 = vsel %vm108, 1, 0
    %v117 = vsel %vm109, 1, 0
    %v118 = vsel %vm110, 1, 0
    %v119 = vsel %vm111, 1, 0
    %v120 = vsel %vm112, 1, 0
    %v121 = vsel %vm113, 1, 0
    %v122 = vcvt.s32.f32 %v114
    %v123 = vcvt.s32.f32 %v115
    %v124 = vcvt.s32.f32 %v116
    %v125 = vcvt.s32.f32 %v117
    %v126 = vcvt.s32.f32 %v118
    %v127 = vcvt.s32.f32 %v119
    %v128 = vcvt.s32.f32 %v120
    %v129 = vcvt.s32.f32 %v121
    %v130 = vadd.f32 %v122, %v124
    %v131 = vrot.slane %v130, 4
    %v132 = vadd.f32 %v130, %v131
    %v133 = vrot.slane %v132, 2
    %v134 = vadd.f32 %v132, %v133
    %v135 = vrot.slane %v134, 1
    %v136 = vadd.f32 %v134, %v135
    %v137 = vadd.f32 %v123, %v125
    %v138 = vrot.slane %v137, 4
    %v139 = vadd.f32 %v137, %v138
    %v140 = vrot.slane %v139, 2
    %v141 = vadd.f32 %v139, %v140
    %v142 = vrot.slane %v141, 1
    %v143 = vadd.f32 %v141, %v142
    %v144 = vadd.f32 %v126, %v128
    %v145 = vrot.slane %v144, 4
    %v146 = vadd.f32 %v144, %v145
    %v147 = vrot.slane %v146, 2
    %v148 = vadd.f32 %v146, %v147
    %v149 = vrot.slane %v148, 1
    %v150 = vadd.f32 %v148, %v149
    %v151 = vadd.f32 %v127, %v129
    %v152 = vrot.slane %v151, 4
    %v153 = vadd.f32 %v151, %v152
    %v154 = vrot.slane %v153, 2
    %v155 = vadd.f32 %v153, %v154
    %v156 = vrot.slane %v155, 1
    %v157 = vadd.f32 %v155, %v156
    %v158 = vlaneseq
    %v159 = vshrl.u32 %v158, 7
    %v160 = vsub.s32 0, %v159
    %v161 = vrot.slane %v70, %v160
    %vm166 = vcmask 1041409
    %v167 = vsel %vm166, %v150, %v136
    %v168 = vsel %vm166, %v157, %v143
    %171 = vmatprep.subr.mxu0 0.0
    %172 = vmatpush1.msra.mxu0 %v53
    %173 = vmatprep.subr.mxu0 0.0
    %174 = vmatpush1.msra.mxu0 %v52
    %175 = vmatprep.subr.mxu0 0.0
    %176 = vmatpush1.msra.mxu0 %v51
    %177 = vmatprep.subr.mxu0 0.0
    %178 = vmatpush1.msra.mxu0 %v50
    %179 = vmatprep.subr.mxu0 0.0
    %180 = vmatpush1.msra.mxu0 %v49
    %181 = vmatprep.subr.mxu0 0.0
    %182 = vmatpush1.msra.mxu0 %v48
    %183 = vmatprep.subr.mxu0 0.0
    %184 = vmatpush1.msra.mxu0 %v47
    %185 = vmatprep.subr.mxu0 0.0
    %186 = vmatpush1.msra.mxu0 %v46
    %187 = vmatprep.subr.mxu0 0.0
    %188 = vmatpush1.msra.mxu0 %v45
    %189 = vmatprep.subr.mxu0 0.0
    %190 = vmatpush1.msra.mxu0 %v44
    %191 = vmatprep.subr.mxu0 0.0
    %192 = vmatpush1.msra.mxu0 %v43
    %193 = vmatprep.subr.mxu0 0.0
    %194 = vmatpush1.msra.mxu0 %v42
    %195 = vmatprep.subr.mxu0 0.0
    %196 = vmatpush1.msra.mxu0 %v41
    %197 = vmatprep.subr.mxu0 0.0
    %198 = vmatpush1.msra.mxu0 %v40
    %199 = vmatprep.subr.mxu0 0.0
    %200 = vmatpush1.msra.mxu0 %v39
    %201 = vmatprep.subr.mxu0 0.0
    %202 = vmatpush1.msra.mxu0 %v38
    %203 = vmatprep.subr.mxu0 0.0
    %204 = vmatpush2.msra.mxu0 %v69
    %205 = vmatprep.subr.mxu0 0.0
    %206 = vmatpush2.msra.mxu0 %v68
    %207 = vmatprep.subr.mxu0 0.0
    %208 = vmatpush2.msra.mxu0 %v67
    %209 = vmatprep.subr.mxu0 0.0
    %210 = vmatpush2.msra.mxu0 %v66
    %211 = vmatprep.subr.mxu0 0.0
    %212 = vmatpush2.msra.mxu0 %v65
    %213 = vmatprep.subr.mxu0 0.0
    %214 = vmatpush2.msra.mxu0 %v64
    %215 = vmatprep.subr.mxu0 0.0
    %216 = vmatpush2.msra.mxu0 %v63
    %217 = vmatprep.subr.mxu0 0.0
    %218 = vmatpush2.msra.mxu0 %v62
    %219 = vmatprep.subr.mxu0 0.0
    %220 = vmatpush2.msra.mxu0 %v61
    %221 = vmatprep.subr.mxu0 0.0
    %222 = vmatpush2.msra.mxu0 %v60
    %223 = vmatprep.subr.mxu0 0.0
    %224 = vmatpush2.msra.mxu0 %v59
    %225 = vmatprep.subr.mxu0 0.0
    %226 = vmatpush2.msra.mxu0 %v58
    %227 = vmatprep.subr.mxu0 0.0
    %228 = vmatpush2.msra.mxu0 %v57
    %229 = vmatprep.subr.mxu0 0.0
    %230 = vmatpush2.msra.mxu0 %v56
    %231 = vmatprep.subr.mxu0 0.0
    %232 = vmatpush2.msra.mxu0 %v55
    %233 = vmatprep.subr.mxu0 0.0
    %234 = vmatpush2.msra.mxu0 %v54
    %235 = vmatprep.mubr.f32.mxu0 %v168
    %236 = vmatmul.mubr.f32.gmra.mxu0 %v167
    %v237 = vpop.f32.mrf.mxu0
    %v238 = vadd.f32 %v161, %v237
    %v239 = vpop.f32.mrf.mxu0
    %240 = vdwg.mxu0
    %v241 = vtanh.pop %v238
    %vm242 = vcmask 97280
    %v244 = vsel %vm242, %v241, 0
    %vm246 = vcmask 1043456
    %v248 = vsel %vm246, %v72, 0
    %250 = vmatprep.subr.mxu0 0.0
    %251 = vmatpush1.msra.mxu0 0.0
    %252 = vmatprep.subr.mxu0 0.0
    %253 = vmatpush1.msra.mxu0 0.0
    %254 = vmatprep.subr.mxu0 0.0
    %255 = vmatpush1.msra.mxu0 0.0
    %256 = vmatprep.subr.mxu0 0.0
    %257 = vmatpush1.msra.mxu0 0.0
    %258 = vmatprep.subr.mxu0 0.0
    %259 = vmatpush1.msra.mxu0 0.0
    %260 = vmatprep.subr.mxu0 0.0
    %261 = vmatpush1.msra.mxu0 0.0
    %262 = vmatprep.subr.mxu0 0.0
    %263 = vmatpush1.msra.mxu0 0.0
    %264 = vmatprep.subr.mxu0 0.0
    %265 = vmatpush1.msra.mxu0 0.0
    %266 = vmatprep.subr.mxu0 0.0
    %267 = vmatpush1.msra.mxu0 0.0
    %268 = vmatprep.subr.mxu0 0.0
    %269 = vmatpush1.msra.mxu0 0.0
    %270 = vmatprep.subr.mxu0 0.0
    %271 = vmatpush1.msra.mxu0 0.0
    %272 = vmatprep.subr.mxu0 0.0
    %273 = vmatpush1.msra.mxu0 0.0
    %274 = vmatprep.subr.mxu0 0.0
    %275 = vmatpush1.msra.mxu0 0.0
    %276 = vmatprep.subr.mxu0 0.0
    %277 = vmatpush1.msra.mxu0 0.0
    %278 = vmatprep.subr.mxu0 0.0
    %279 = vmatpush1.msra.mxu0 %v248
    %280 = vmatprep.subr.mxu0 0.0
    %281 = vmatpush1.msra.mxu0 %v71
    %282 = vmatprep.subr.mxu0 0.0
    %283 = vmatpush2.msra.mxu0 0.0
    %284 = vmatprep.subr.mxu0 0.0
    %285 = vmatpush2.msra.mxu0 0.0
    %286 = vmatprep.subr.mxu0 0.0
    %287 = vmatpush2.msra.mxu0 0.0
    %288 = vmatprep.subr.mxu0 0.0
    %289 = vmatpush2.msra.mxu0 0.0
    %290 = vmatprep.subr.mxu0 0.0
    %291 = vmatpush2.msra.mxu0 0.0
    %292 = vmatprep.subr.mxu0 0.0
    %293 = vmatpush2.msra.mxu0 0.0
    %294 = vmatprep.subr.mxu0 0.0
    %295 = vmatpush2.msra.mxu0 0.0
    %296 = vmatprep.subr.mxu0 0.0
    %297 = vmatpush2.msra.mxu0 0.0
    %298 = vmatprep.subr.mxu0 0.0
    %299 = vmatpush2.msra.mxu0 0.0
    %300 = vmatprep.subr.mxu0 0.0
    %301 = vmatpush2.msra.mxu0 0.0
    %302 = vmatprep.subr.mxu0 0.0
    %303 = vmatpush2.msra.mxu0 0.0
    %304 = vmatprep.subr.mxu0 0.0
    %305 = vmatpush2.msra.mxu0 0.0
    %306 = vmatprep.subr.mxu0 0.0
    %307 = vmatpush2.msra.mxu0 0.0
    %308 = vmatprep.subr.mxu0 0.0
    %309 = vmatpush2.msra.mxu0 0.0
    %310 = vmatprep.subr.mxu0 0.0
    %311 = vmatpush2.msra.mxu0 0.0
    %312 = vmatprep.subr.mxu0 0.0
    %313 = vmatpush2.msra.mxu0 0.0
    %314 = vmatprep.mubr.f32.mxu0 0.0
    %315 = vmatmul.mubr.f32.gmra.mxu0 %v244
    %v316 = vpop.f32.mrf.mxu0
    %v317 = vadd.f32 0.0, %v316
    %v318 = vpop.f32.mrf.mxu0
    %319 = vdwg.mxu0
    %321 = vrot.lane.b32.xlu0 %v317, 24
    %v322 = vpop.permute.xlu0 %321
    %v324 = vadd.f32 %v238, %v322
    %v325 = vtanh.pop %v324
    %327 = vrot.lane.b32.xlu0 %v325, 104
    %v328 = vpop.permute.xlu0 %327
    %v329 = vsel %vm242, %v328, 0
    %331 = vmatprep.subr.mxu0 0.0
    %332 = vmatpush1.msra.mxu0 0.0
    %333 = vmatprep.subr.mxu0 0.0
    %334 = vmatpush1.msra.mxu0 0.0
    %335 = vmatprep.subr.mxu0 0.0
    %336 = vmatpush1.msra.mxu0 0.0
    %337 = vmatprep.subr.mxu0 0.0
    %338 = vmatpush1.msra.mxu0 0.0
    %339 = vmatprep.subr.mxu0 0.0
    %340 = vmatpush1.msra.mxu0 0.0
    %341 = vmatprep.subr.mxu0 0.0
    %342 = vmatpush1.msra.mxu0 0.0
    %343 = vmatprep.subr.mxu0 0.0
    %344 = vmatpush1.msra.mxu0 0.0
    %345 = vmatprep.subr.mxu0 0.0
    %346 = vmatpush1.msra.mxu0 0.0
    %347 = vmatprep.subr.mxu0 0.0
    %348 = vmatpush1.msra.mxu0 0.0
    %349 = vmatprep.subr.mxu0 0.0
    %350 = vmatpush1.msra.mxu0 0.0
    %351 = vmatprep.subr.mxu0 0.0
    %352 = vmatpush1.msra.mxu0 0.0
    %353 = vmatprep.subr.mxu0 0.0
    %354 = vmatpush1.msra.mxu0 0.0
    %355 = vmatprep.subr.mxu0 0.0
    %356 = vmatpush1.msra.mxu0 0.0
    %357 = vmatprep.subr.mxu0 0.0
    %358 = vmatpush1.msra.mxu0 0.0
    %359 = vmatprep.subr.mxu0 0.0
    %360 = vmatpush1.msra.mxu0 %v248
    %361 = vmatprep.subr.mxu0 0.0
    %362 = vmatpush1.msra.mxu0 %v71
    %363 = vmatprep.subr.mxu0 0.0
    %364 = vmatpush2.msra.mxu0 0.0
    %365 = vmatprep.subr.mxu0 0.0
    %366 = vmatpush2.msra.mxu0 0.0
    %367 = vmatprep.subr.mxu0 0.0
    %368 = vmatpush2.msra.mxu0 0.0
    %369 = vmatprep.subr.mxu0 0.0
    %370 = vmatpush2.msra.mxu0 0.0
    %371 = vmatprep.subr.mxu0 0.0
    %372 = vmatpush2.msra.mxu0 0.0
    %373 = vmatprep.subr.mxu0 0.0
    %374 = vmatpush2.msra.mxu0 0.0
    %375 = vmatprep.subr.mxu0 0.0
    %376 = vmatpush2.msra.mxu0 0.0
    %377 = vmatprep.subr.mxu0 0.0
    %378 = vmatpush2.msra.mxu0 0.0
    %379 = vmatprep.subr.mxu0 0.0
    %380 = vmatpush2.msra.mxu0 0.0
    %381 = vmatprep.subr.mxu0 0.0
    %382 = vmatpush2.msra.mxu0 0.0
    %383 = vmatprep.subr.mxu0 0.0
    %384 = vmatpush2.msra.mxu0 0.0
    %385 = vmatprep.subr.mxu0 0.0
    %386 = vmatpush2.msra.mxu0 0.0
    %387 = vmatprep.subr.mxu0 0.0
    %388 = vmatpush2.msra.mxu0 0.0
    %389 = vmatprep.subr.mxu0 0.0
    %390 = vmatpush2.msra.mxu0 0.0
    %391 = vmatprep.subr.mxu0 0.0
    %392 = vmatpush2.msra.mxu0 0.0
    %393 = vmatprep.subr.mxu0 0.0
    %394 = vmatpush2.msra.mxu0 0.0
    %395 = vmatprep.mubr.f32.mxu0 0.0
    %396 = vmatmul.mubr.f32.gmra.mxu0 %v329
    %v397 = vpop.f32.mrf.mxu0
    %v398 = vadd.f32 0.0, %v397
    %v399 = vpop.f32.mrf.mxu0
    %400 = vdwg.mxu0
    %402 = vrot.lane.b32.xlu0 %v398, 48
    %v403 = vpop.permute.xlu0 %402
    %v405 = vadd.f32 %v238, %v403
    %v406 = vtanh.pop %v405
    %408 = vrot.lane.b32.xlu0 %v406, 80
    %v409 = vpop.permute.xlu0 %408
    %v410 = vsel %vm242, %v409, 0
    %412 = vmatprep.subr.mxu0 0.0
    %413 = vmatpush1.msra.mxu0 0.0
    %414 = vmatprep.subr.mxu0 0.0
    %415 = vmatpush1.msra.mxu0 0.0
    %416 = vmatprep.subr.mxu0 0.0
    %417 = vmatpush1.msra.mxu0 0.0
    %418 = vmatprep.subr.mxu0 0.0
    %419 = vmatpush1.msra.mxu0 0.0
    %420 = vmatprep.subr.mxu0 0.0
    %421 = vmatpush1.msra.mxu0 0.0
    %422 = vmatprep.subr.mxu0 0.0
    %423 = vmatpush1.msra.mxu0 0.0
    %424 = vmatprep.subr.mxu0 0.0
    %425 = vmatpush1.msra.mxu0 0.0
    %426 = vmatprep.subr.mxu0 0.0
    %427 = vmatpush1.msra.mxu0 0.0
    %428 = vmatprep.subr.mxu0 0.0
    %429 = vmatpush1.msra.mxu0 0.0
    %430 = vmatprep.subr.mxu0 0.0
    %431 = vmatpush1.msra.mxu0 0.0
    %432 = vmatprep.subr.mxu0 0.0
    %433 = vmatpush1.msra.mxu0 0.0
    %434 = vmatprep.subr.mxu0 0.0
    %435 = vmatpush1.msra.mxu0 0.0
    %436 = vmatprep.subr.mxu0 0.0
    %437 = vmatpush1.msra.mxu0 0.0
    %438 = vmatprep.subr.mxu0 0.0
    %439 = vmatpush1.msra.mxu0 0.0
    %440 = vmatprep.subr.mxu0 0.0
    %441 = vmatpush1.msra.mxu0 %v248
    %442 = vmatprep.subr.mxu0 0.0
    %443 = vmatpush1.msra.mxu0 %v71
    %444 = vmatprep.subr.mxu0 0.0
    %445 = vmatpush2.msra.mxu0 0.0
    %446 = vmatprep.subr.mxu0 0.0
    %447 = vmatpush2.msra.mxu0 0.0
    %448 = vmatprep.subr.mxu0 0.0
    %449 = vmatpush2.msra.mxu0 0.0
    %450 = vmatprep.subr.mxu0 0.0
    %451 = vmatpush2.msra.mxu0 0.0
    %452 = vmatprep.subr.mxu0 0.0
    %453 = vmatpush2.msra.mxu0 0.0
    %454 = vmatprep.subr.mxu0 0.0
    %455 = vmatpush2.msra.mxu0 0.0
    %456 = vmatprep.subr.mxu0 0.0
    %457 = vmatpush2.msra.mxu0 0.0
    %458 = vmatprep.subr.mxu0 0.0
    %459 = vmatpush2.msra.mxu0 0.0
    %460 = vmatprep.subr.mxu0 0.0
    %461 = vmatpush2.msra.mxu0 0.0
    %462 = vmatprep.subr.mxu0 0.0
    %463 = vmatpush2.msra.mxu0 0.0
    %464 = vmatprep.subr.mxu0 0.0
    %465 = vmatpush2.msra.mxu0 0.0
    %466 = vmatprep.subr.mxu0 0.0
    %467 = vmatpush2.msra.mxu0 0.0
    %468 = vmatprep.subr.mxu0 0.0
    %469 = vmatpush2.msra.mxu0 0.0
    %470 = vmatprep.subr.mxu0 0.0
    %471 = vmatpush2.msra.mxu0 0.0
    %472 = vmatprep.subr.mxu0 0.0
    %473 = vmatpush2.msra.mxu0 0.0
    %474 = vmatprep.subr.mxu0 0.0
    %475 = vmatpush2.msra.mxu0 0.0
    %476 = vmatprep.mubr.f32.mxu0 0.0
    %477 = vmatmul.mubr.f32.gmra.mxu0 %v410
    %v478 = vpop.f32.mrf.mxu0
    %v479 = vadd.f32 0.0, %v478
    %v480 = vpop.f32.mrf.mxu0
    %481 = vdwg.mxu0
    %483 = vrot.lane.b32.xlu0 %v479, 72
    %v484 = vpop.permute.xlu0 %483
    %v486 = vadd.f32 %v238, %v484
    %v487 = vtanh.pop %v486
    %488 = vrot.lane.b32.xlu0 %v241, 44
    %v489 = vpop.permute.xlu0 %488
    %v490 = vsel %vm242, %v489, 0
    %v493 = vsel %vm246, %v76, 0
    %495 = vmatprep.subr.mxu0 0.0
    %496 = vmatpush1.msra.mxu0 0.0
    %497 = vmatprep.subr.mxu0 0.0
    %498 = vmatpush1.msra.mxu0 0.0
    %499 = vmatprep.subr.mxu0 0.0
    %500 = vmatpush1.msra.mxu0 0.0
    %501 = vmatprep.subr.mxu0 0.0
    %502 = vmatpush1.msra.mxu0 0.0
    %503 = vmatprep.subr.mxu0 0.0
    %504 = vmatpush1.msra.mxu0 0.0
    %505 = vmatprep.subr.mxu0 0.0
    %506 = vmatpush1.msra.mxu0 0.0
    %507 = vmatprep.subr.mxu0 0.0
    %508 = vmatpush1.msra.mxu0 0.0
    %509 = vmatprep.subr.mxu0 0.0
    %510 = vmatpush1.msra.mxu0 0.0
    %511 = vmatprep.subr.mxu0 0.0
    %512 = vmatpush1.msra.mxu0 0.0
    %513 = vmatprep.subr.mxu0 0.0
    %514 = vmatpush1.msra.mxu0 0.0
    %515 = vmatprep.subr.mxu0 0.0
    %516 = vmatpush1.msra.mxu0 0.0
    %517 = vmatprep.subr.mxu0 0.0
    %518 = vmatpush1.msra.mxu0 0.0
    %519 = vmatprep.subr.mxu0 0.0
    %520 = vmatpush1.msra.mxu0 0.0
    %521 = vmatprep.subr.mxu0 0.0
    %522 = vmatpush1.msra.mxu0 0.0
    %523 = vmatprep.subr.mxu0 0.0
    %524 = vmatpush1.msra.mxu0 %v493
    %525 = vmatprep.subr.mxu0 0.0
    %526 = vmatpush1.msra.mxu0 %v75
    %527 = vmatprep.subr.mxu0 0.0
    %528 = vmatpush2.msra.mxu0 0.0
    %529 = vmatprep.subr.mxu0 0.0
    %530 = vmatpush2.msra.mxu0 0.0
    %531 = vmatprep.subr.mxu0 0.0
    %532 = vmatpush2.msra.mxu0 0.0
    %533 = vmatprep.subr.mxu0 0.0
    %534 = vmatpush2.msra.mxu0 0.0
    %535 = vmatprep.subr.mxu0 0.0
    %536 = vmatpush2.msra.mxu0 0.0
    %537 = vmatprep.subr.mxu0 0.0
    %538 = vmatpush2.msra.mxu0 0.0
    %539 = vmatprep.subr.mxu0 0.0
    %540 = vmatpush2.msra.mxu0 0.0
    %541 = vmatprep.subr.mxu0 0.0
    %542 = vmatpush2.msra.mxu0 0.0
    %543 = vmatprep.subr.mxu0 0.0
    %544 = vmatpush2.msra.mxu0 0.0
    %545 = vmatprep.subr.mxu0 0.0
    %546 = vmatpush2.msra.mxu0 0.0
    %547 = vmatprep.subr.mxu0 0.0
    %548 = vmatpush2.msra.mxu0 0.0
    %549 = vmatprep.subr.mxu0 0.0
    %550 = vmatpush2.msra.mxu0 0.0
    %551 = vmatprep.subr.mxu0 0.0
    %552 = vmatpush2.msra.mxu0 0.0
    %553 = vmatprep.subr.mxu0 0.0
    %554 = vmatpush2.msra.mxu0 0.0
    %555 = vmatprep.subr.mxu0 0.0
    %556 = vmatpush2.msra.mxu0 0.0
    %557 = vmatprep.subr.mxu0 0.0
    %558 = vmatpush2.msra.mxu0 0.0
    %559 = vmatprep.mubr.f32.mxu0 0.0
    %560 = vmatmul.mubr.f32.gmra.mxu0 %v490
    %v561 = vpop.f32.mrf.mxu0
    %v562 = vadd.f32 0.0, %v561
    %v563 = vpop.f32.mrf.mxu0
    %564 = vdwg.mxu0
    %566 = vrot.lane.b32.xlu0 %v487, 56
    %v567 = vpop.permute.xlu0 %566
    %v568 = vsel %vm242, %v567, 0
    %v571 = vsel %vm246, %v74, 0
    %573 = vmatprep.subr.mxu0 0.0
    %574 = vmatpush1.msra.mxu0 0.0
    %575 = vmatprep.subr.mxu0 0.0
    %576 = vmatpush1.msra.mxu0 0.0
    %577 = vmatprep.subr.mxu0 0.0
    %578 = vmatpush1.msra.mxu0 0.0
    %579 = vmatprep.subr.mxu0 0.0
    %580 = vmatpush1.msra.mxu0 0.0
    %581 = vmatprep.subr.mxu0 0.0
    %582 = vmatpush1.msra.mxu0 0.0
    %583 = vmatprep.subr.mxu0 0.0
    %584 = vmatpush1.msra.mxu0 0.0
    %585 = vmatprep.subr.mxu0 0.0
    %586 = vmatpush1.msra.mxu0 0.0
    %587 = vmatprep.subr.mxu0 0.0
    %588 = vmatpush1.msra.mxu0 0.0
    %589 = vmatprep.subr.mxu0 0.0
    %590 = vmatpush1.msra.mxu0 0.0
    %591 = vmatprep.subr.mxu0 0.0
    %592 = vmatpush1.msra.mxu0 0.0
    %593 = vmatprep.subr.mxu0 0.0
    %594 = vmatpush1.msra.mxu0 0.0
    %595 = vmatprep.subr.mxu0 0.0
    %596 = vmatpush1.msra.mxu0 0.0
    %597 = vmatprep.subr.mxu0 0.0
    %598 = vmatpush1.msra.mxu0 0.0
    %599 = vmatprep.subr.mxu0 0.0
    %600 = vmatpush1.msra.mxu0 0.0
    %601 = vmatprep.subr.mxu0 0.0
    %602 = vmatpush1.msra.mxu0 %v571
    %603 = vmatprep.subr.mxu0 0.0
    %604 = vmatpush1.msra.mxu0 %v73
    %605 = vmatprep.subr.mxu0 0.0
    %606 = vmatpush2.msra.mxu0 0.0
    %607 = vmatprep.subr.mxu0 0.0
    %608 = vmatpush2.msra.mxu0 0.0
    %609 = vmatprep.subr.mxu0 0.0
    %610 = vmatpush2.msra.mxu0 0.0
    %611 = vmatprep.subr.mxu0 0.0
    %612 = vmatpush2.msra.mxu0 0.0
    %613 = vmatprep.subr.mxu0 0.0
    %614 = vmatpush2.msra.mxu0 0.0
    %615 = vmatprep.subr.mxu0 0.0
    %616 = vmatpush2.msra.mxu0 0.0
    %617 = vmatprep.subr.mxu0 0.0
    %618 = vmatpush2.msra.mxu0 0.0
    %619 = vmatprep.subr.mxu0 0.0
    %620 = vmatpush2.msra.mxu0 0.0
    %621 = vmatprep.subr.mxu0 0.0
    %622 = vmatpush2.msra.mxu0 0.0
    %623 = vmatprep.subr.mxu0 0.0
    %624 = vmatpush2.msra.mxu0 0.0
    %625 = vmatprep.subr.mxu0 0.0
    %626 = vmatpush2.msra.mxu0 0.0
    %627 = vmatprep.subr.mxu0 0.0
    %628 = vmatpush2.msra.mxu0 0.0
    %629 = vmatprep.subr.mxu0 0.0
    %630 = vmatpush2.msra.mxu0 0.0
    %631 = vmatprep.subr.mxu0 0.0
    %632 = vmatpush2.msra.mxu0 0.0
    %633 = vmatprep.subr.mxu0 0.0
    %634 = vmatpush2.msra.mxu0 0.0
    %635 = vmatprep.subr.mxu0 0.0
    %636 = vmatpush2.msra.mxu0 0.0
    %637 = vmatprep.mubr.f32.mxu0 0.0
    %638 = vmatmul.mubr.f32.gmra.mxu0 %v568
    %v639 = vpop.f32.mrf.mxu0
    %v640 = vadd.f32 %v562, %v639
    %v641 = vpop.f32.mrf.mxu0
    %642 = vdwg.mxu0
    %v643 = vlaneseq
    %v644 = vshrl.u32 %v643, 7
    %v645 = vsub.s32 0, %v644
    %v646 = vrot.slane %v77, %v645
    %v647 = vadd.f32 %v640, %v646
    %vm648 = vcmask 17408
    %649 = vst.msk [vmem:[#allocation7] sm:$0x3] %vm648, %v647
    // Predicated region
    $region18: #{lstm_forward.1} parent=1 // pred_check
      _
    $region19: #{lstm_forward.1} parent=1 // pred_check_branch
      %651 = sbr.rel (0) target = $region21
    $region20: #{lstm_forward.1} parent=1 // pred_region
      %s653 = ssub.s32 32, 32
      %654 = vsyncadd [#allocation4], %s653
      %s656 = sshll.u32 [#allocation7], 4
      %s657 = int_to_ptr.vmem [resolvable:$true] %s656
      %659 = dma.vmem_to_hbm [thread:$0]  %s657, 32, %s2, [#allocation4]
    $region21: #{lstm_forward.1} parent=1 // pred_fallthru
      _
    // Predicated region
    $region22: #{lstm_forward.1} parent=1 // pred_check
      _
    $region23: #{lstm_forward.1} parent=1 // pred_check_branch
      %661 = sbr.rel (0) target = $region25
    $region24: #{lstm_forward.1} parent=1 // pred_region
      %662 = dma.done [#allocation4], 32
    $region25: #{lstm_forward.1} parent=1 // pred_fallthru
      _
    %663 = vsyncpa [#allocation3], 1
    %664 = vsyncpa [#allocation6], 1
    %665 = vsyncpa [#allocation4], 1

</llo_original>
